<compile_context>
chip_gen: v7x
topology: tpu7x:2x2x1
jax: 0.10.0
libtpu: 0.0.40
codegen_flags: <defaults>
</compile_context>

<pallas_src>
import functools

import jax
import jax.numpy as jnp
from jax import lax
from jax.experimental import pallas as pl
from jax.experimental.pallas import tpu as pltpu

_BN_EPS = 1e-5

# Tiling constants.
#   _TILE_M = 512 rows keeps the double-buffered working set at a few MiB,
#   comfortably inside v7x's 64 MiB physical VMEM; v6e/v5e (128 MiB) could go
#   to 1024 but 512 already sits near the measured ~85% HBM-roofline plateau.
_TILE_M = 512
_TILE_K = 512
# Explicit scoped-VMEM limit: above the 32 MiB default, below v7x's 64 MiB.
_VMEM_LIMIT_BYTES = 48 * 1024 * 1024


def _round_up(x, m):
    return ((x + m - 1) // m) * m


def _pad2d(a, rows, cols):
    return jnp.pad(a, ((0, rows - a.shape[0]), (0, cols - a.shape[1])))


# ---------------------------------------------------------------------------
# Kernel 1: tiled matmul (conv via im2col) + per-tile BN partial statistics
# ---------------------------------------------------------------------------
def _mm_stats_kernel(p_ref, w_ref, y_ref, sum_ref, ssq_ref, acc_ref):
    k = pl.program_id(1)

    @pl.when(k == 0)
    def _():
        acc_ref[...] = jnp.zeros_like(acc_ref)

    # bf16 x bf16 -> f32 on the MXU.
    acc_ref[...] += jnp.dot(p_ref[...], w_ref[...],
                            preferred_element_type=jnp.float32)

    @pl.when(k == pl.num_programs(1) - 1)
    def _():
        y = acc_ref[...]
        y_ref[...] = y
        # Per-(M-tile) per-channel partial sums for two-pass BatchNorm.
        sum_ref[...] = jnp.sum(y, axis=0, keepdims=True)[None]
        ssq_ref[...] = jnp.sum(y * y, axis=0, keepdims=True)[None]


def matmul_with_stats(patches, w_mat, *, tile_m, tile_k):
    """(M_pad,K_pad) @ (K_pad,C_pad) -> conv output (f32) + per-tile sum/sumsq."""
    m_pad, k_pad = patches.shape
    c_pad = w_mat.shape[1]
    nm, nk = m_pad // tile_m, k_pad // tile_k

    bytes_accessed = (patches.size * patches.dtype.itemsize
                      + w_mat.size * w_mat.dtype.itemsize * nm
                      + m_pad * c_pad * 4)
    y, psum, pssq = pl.pallas_call(
        _mm_stats_kernel,
        grid=(nm, nk),
        in_specs=[
            pl.BlockSpec((tile_m, tile_k), lambda i, k: (i, k)),
            pl.BlockSpec((tile_k, c_pad), lambda i, k: (k, 0)),
        ],
        out_specs=(
            pl.BlockSpec((tile_m, c_pad), lambda i, k: (i, 0)),
            pl.BlockSpec((1, 1, c_pad), lambda i, k: (i, 0, 0)),
            pl.BlockSpec((1, 1, c_pad), lambda i, k: (i, 0, 0)),
        ),
        out_shape=(
            jax.ShapeDtypeStruct((m_pad, c_pad), jnp.float32),
            jax.ShapeDtypeStruct((nm, 1, c_pad), jnp.float32),
            jax.ShapeDtypeStruct((nm, 1, c_pad), jnp.float32),
        ),
        scratch_shapes=[pltpu.VMEM((tile_m, c_pad), jnp.float32)],
        compiler_params=pltpu.CompilerParams(
            dimension_semantics=("parallel", "arbitrary"),
            vmem_limit_bytes=_VMEM_LIMIT_BYTES,
        ),
        cost_estimate=pl.CostEstimate(
            flops=2 * m_pad * k_pad * c_pad,
            transcendentals=0,
            bytes_accessed=bytes_accessed,
        ),
    )(patches, w_mat)
    # Tiny (nm, C) reduction of the per-tile partials is plain-JAX glue.
    return y, jnp.sum(psum, axis=0)[0], jnp.sum(pssq, axis=0)[0]


# ---------------------------------------------------------------------------
# Kernel 2: folded-BN affine + optional ReLU + residual (with its own BN folded)
# ---------------------------------------------------------------------------
def _bn_epilogue_kernel(*refs, relu, has_residual):
    if has_residual:
        y_ref, sc_ref, sh_ref, r_ref, rsc_ref, rsh_ref, o_ref = refs
    else:
        y_ref, sc_ref, sh_ref, o_ref = refs

    # Folded BatchNorm affine: 1 mul + 1 add per element.
    y = y_ref[...].astype(jnp.float32) * sc_ref[...] + sh_ref[...]
    if relu:  # the module applies ReLU BEFORE the residual add (see spec).
        y = jnp.maximum(y, 0.0)
    if has_residual:
        y = y + (r_ref[...].astype(jnp.float32) * rsc_ref[...] + rsh_ref[...])
    o_ref[...] = y.astype(o_ref.dtype)


def bn_epilogue(y, scale, shift, residual=None, res_scale=None, res_shift=None,
                *, relu, tile_m, out_dtype=jnp.float32):
    m_pad, c_pad = y.shape
    nm = m_pad // tile_m

    row_spec = pl.BlockSpec((tile_m, c_pad), lambda i: (i, 0))
    vec_spec = pl.BlockSpec((1, c_pad), lambda i: (0, 0))

    inputs = [y, scale, shift]
    in_specs = [row_spec, vec_spec, vec_spec]
    has_res = residual is not None
    if has_res:
        inputs += [residual, res_scale, res_shift]
        in_specs += [row_spec, vec_spec, vec_spec]

    kernel = functools.partial(_bn_epilogue_kernel, relu=relu,
                               has_residual=has_res)
    return pl.pallas_call(
        kernel,
        grid=(nm,),
        in_specs=in_specs,
        out_specs=row_spec,
        out_shape=jax.ShapeDtypeStruct((m_pad, c_pad), out_dtype),
        compiler_params=pltpu.CompilerParams(
            dimension_semantics=("parallel",),
            vmem_limit_bytes=_VMEM_LIMIT_BYTES,
        ),
        cost_estimate=pl.CostEstimate(
            flops=4 * m_pad * c_pad,
            transcendentals=0,
            bytes_accessed=sum(a.size * a.dtype.itemsize for a in inputs)
            + m_pad * c_pad * jnp.dtype(out_dtype).itemsize,
        ),
    )(*inputs)


# ---------------------------------------------------------------------------
# Plain-JAX glue: im2col, weight re-layout, BN fold
# ---------------------------------------------------------------------------
def im2col(x, ksize, stride, padding, dtype=jnp.bfloat16):
    """x: (N,H,W,C) -> (N*Ho*Wo, ksize*ksize*C) patches (cast to `dtype`)."""
    # TODO(synk): build the patch tile in-kernel from a haloed input tile via
    # manual DMA to avoid materializing the 9x-expanded patch tensor in HBM.
    n, h, w, c = x.shape
    xp = jnp.pad(x, ((0, 0), (padding, padding), (padding, padding), (0, 0)))
    ho = (h + 2 * padding - ksize) // stride + 1
    wo = (w + 2 * padding - ksize) // stride + 1
    cols = []
    for kh in range(ksize):
        for kw in range(ksize):
            cols.append(xp[:, kh:kh + stride * (ho - 1) + 1:stride,
                              kw:kw + stride * (wo - 1) + 1:stride, :])
    patches = jnp.concatenate(cols, axis=-1)                 # (N,Ho,Wo,k*k*C)
    return patches.reshape(n * ho * wo, ksize * ksize * c).astype(dtype), ho, wo


def oihw_to_matmul(w_oihw):
    """PyTorch (Cout,Cin,kh,kw) -> (kh*kw*Cin, Cout), matching im2col order."""
    cout = w_oihw.shape[0]
    return jnp.transpose(w_oihw, (2, 3, 1, 0)).reshape(-1, cout)


def _k_tiling(k):
    k_pad = _round_up(k, 128)
    if k_pad <= _TILE_K:
        return k_pad, k_pad
    k_pad = _round_up(k_pad, _TILE_K)
    return k_pad, _TILE_K


def _fold_bn(ch_sum, ch_ssq, m_true, gamma, beta, c_pad, eps):
    """Training-mode BN (batch stats, biased var) folded to per-channel scale/shift."""
    mean = ch_sum / m_true
    var = jnp.maximum(ch_ssq / m_true - mean * mean, 0.0)
    g = jnp.pad(gamma.astype(jnp.float32), (0, c_pad - gamma.shape[0]))
    b = jnp.pad(beta.astype(jnp.float32), (0, c_pad - beta.shape[0]))
    scale = g * lax.rsqrt(var + eps)
    shift = b - mean * scale
    return scale.reshape(1, c_pad), shift.reshape(1, c_pad)


def _conv_stage(patches, w_oihw, m_pad, c_pad, tile_m):
    """Pad operands, cast weights to bf16, run the matmul+stats kernel."""
    w = oihw_to_matmul(w_oihw)
    k_pad, tile_k = _k_tiling(w.shape[0])
    p = _pad2d(patches, m_pad, k_pad)                        # patches already bf16
    wp = _pad2d(w, k_pad, c_pad).astype(jnp.bfloat16)
    return matmul_with_stats(p, wp, tile_m=tile_m, tile_k=tile_k)


# ---------------------------------------------------------------------------
# ResNetBasicBlock forward
# ---------------------------------------------------------------------------
def resnet_basic_block(x_nchw, params, *, stride, add_act=True, eps=_BN_EPS):
    x = jnp.transpose(x_nchw, (0, 2, 3, 1)).astype(jnp.float32)   # NCHW -> NHWC
    n, _, _, cin = x.shape
    cout = params["w1"].shape[0]
    c_pad = _round_up(cout, 128)                  # lane-dense output channels

    # ---- conv1: 3x3, stride=s, pad=1 (no bias) + BN1 + ReLU ----------------
    p1, ho, wo = im2col(x, 3, stride, 1)
    m = n * ho * wo
    tile_m = min(_TILE_M, _round_up(m, 16))
    nm = -(-m // tile_m)
    m_pad = nm * tile_m

    y1, s1, q1 = _conv_stage(p1, params["w1"], m_pad, c_pad, tile_m)
    sc1, sh1 = _fold_bn(s1, q1, m, params["g1"], params["b1"], c_pad, eps)
    # h1 feeds the next bf16 matmul anyway, so emit it directly as bf16.
    h1 = bn_epilogue(y1, sc1, sh1, relu=True, tile_m=tile_m,
                     out_dtype=jnp.bfloat16)
    h1 = h1[:m, :cout].reshape(n, ho, wo, cout)

    # ---- shortcut: conv1x1(stride=s, no bias) + BN, or identity -------------
    if cin != cout or stride != 1:
        xs = x[:, ::stride, ::stride, :].reshape(m, cin).astype(jnp.bfloat16)
        ysc, ssc, qsc = _conv_stage(xs, params["wsc"], m_pad, c_pad, tile_m)
        res = ysc
        rsc, rsh = _fold_bn(ssc, qsc, m, params["gsc"], params["bsc"], c_pad, eps)
    else:
        res = _pad2d(x.reshape(m, cin), m_pad, c_pad)
        rsc = jnp.ones((1, c_pad), jnp.float32)
        rsh = jnp.zeros((1, c_pad), jnp.float32)

    # ---- conv2: 3x3, stride=1, padding='same' + BN2 + [ReLU] + residual -----
    p2, _, _ = im2col(h1, 3, 1, 1)
    y2, s2, q2 = _conv_stage(p2, params["w2"], m_pad, c_pad, tile_m)
    sc2, sh2 = _fold_bn(s2, q2, m, params["g2"], params["b2"], c_pad, eps)

    # Spec semantics: out = self.layers(x) + self.shortcut(x), i.e. the optional
    # final ReLU is applied to bn2(conv2(.)) BEFORE the shortcut is added; the
    # shortcut's own BN is folded and fused into this same epilogue kernel.
    out = bn_epilogue(y2, sc2, sh2, residual=res, res_scale=rsc, res_shift=rsh,
                      relu=add_act, tile_m=tile_m, out_dtype=jnp.float32)
    out = out[:m, :cout].reshape(n, ho, wo, cout)
    return jnp.transpose(out, (0, 3, 1, 2))                      # NHWC -> NCHW


# ---------------------------------------------------------------------------
# Deterministic parameter construction (synthetic; no checkpoint load)
# ---------------------------------------------------------------------------
def make_params(key, in_channels, out_channels):
    ks = jax.random.split(key, 9)
    return {
        "w1": 0.1 * jax.random.normal(ks[0], (out_channels, in_channels, 3, 3), jnp.float32),
        "g1": 1.0 + 0.1 * jax.random.normal(ks[1], (out_channels,), jnp.float32),
        "b1": 0.1 * jax.random.normal(ks[2], (out_channels,), jnp.float32),
        "w2": 0.1 * jax.random.normal(ks[3], (out_channels, out_channels, 3, 3), jnp.float32),
        "g2": 1.0 + 0.1 * jax.random.normal(ks[4], (out_channels,), jnp.float32),
        "b2": 0.1 * jax.random.normal(ks[5], (out_channels,), jnp.float32),
        "wsc": 0.1 * jax.random.normal(ks[6], (out_channels, in_channels, 1, 1), jnp.float32),
        "gsc": 1.0 + 0.1 * jax.random.normal(ks[7], (out_channels,), jnp.float32),
        "bsc": 0.1 * jax.random.normal(ks[8], (out_channels,), jnp.float32),
    }


if __name__ == "__main__":
    N, Cin, H, W = 2, 4, 16, 16
    Cout, stride = 8, 2

    root = jax.random.PRNGKey(0)
    kx, kp = jax.random.split(root)
    x = jax.random.normal(kx, (N, Cin, H, W), jnp.float32)
    params = make_params(kp, Cin, Cout)

    fwd = jax.jit(functools.partial(resnet_basic_block, stride=stride, add_act=True))
    out = fwd(x, params)
    jax.block_until_ready(out)

    assert out.shape == (N, Cout, H // stride, W // stride), out.shape
    assert out.dtype == jnp.float32
    assert bool(jnp.all(jnp.isfinite(out)))
    print("KERNEL_OK")
</pallas_src>

<mosaic_0001>
module attributes {stable_mosaic.version = 11 : i64} {
  func.func @_mm_stats_kernel(%arg0: i32, %arg1: i32, %arg2: memref<128x128xbf16, #tpu.memory_space<vmem>>, %arg3: memref<128x128xbf16, #tpu.memory_space<vmem>>, %arg4: memref<128x128xf32, #tpu.memory_space<vmem>>, %arg5: memref<1x1x128xf32, #tpu.memory_space<vmem>>, %arg6: memref<1x1x128xf32, #tpu.memory_space<vmem>>, %arg7: memref<128x128xf32, #tpu.memory_space<vmem>>) attributes {dimension_semantics = [#tpu.dimension_semantics<parallel>, #tpu.dimension_semantics<arbitrary>], iteration_bounds = array<i64: 1, 1>, scalar_prefetch = 0 : i64, scratch_operands = 1 : i64, tpu.core_type = #tpu.core_type<tc>, window_params = [{transform_indices = @transform_0, window_bounds = array<i64: 128, 128>}, {transform_indices = @transform_1, window_bounds = array<i64: 128, 128>}, {transform_indices = @transform_2, window_bounds = array<i64: 128, 128>}, {transform_indices = @transform_3, window_bounds = array<i64: 1, 1, 128>}, {transform_indices = @transform_4, window_bounds = array<i64: 1, 1, 128>}]} {
    %c0_i32 = arith.constant 0 : i32
    %0 = arith.cmpi eq, %arg1, %c0_i32 : i32
    %1 = arith.extui %0 : i1 to i32
    %c0_i32_0 = arith.constant 0 : i32
    %2 = arith.cmpi ne, %1, %c0_i32_0 : i32
    scf.if %2 {
      %cst_10 = arith.constant 0.000000e+00 : f32
      %12 = vector.broadcast %cst_10 : f32 to vector<128x128xf32>
      %c0_11 = arith.constant 0 : index
      %c0_12 = arith.constant 0 : index
      %13 = vector.load %arg7[%c0_11, %c0_12] : memref<128x128xf32, #tpu.memory_space<vmem>>, vector<128x128xf32>
      tpu.vector_store %arg7[%c0_11, %c0_12], %12 {strides = array<i32>} : memref<128x128xf32, #tpu.memory_space<vmem>>, vector<128x128xf32>,
    } else {
    }
    %c0 = arith.constant 0 : index
    %c0_1 = arith.constant 0 : index
    %3 = vector.load %arg7[%c0, %c0_1] : memref<128x128xf32, #tpu.memory_space<vmem>>, vector<128x128xf32>
    %c0_2 = arith.constant 0 : index
    %c0_3 = arith.constant 0 : index
    %4 = vector.load %arg2[%c0_2, %c0_3] : memref<128x128xbf16, #tpu.memory_space<vmem>>, vector<128x128xbf16>
    %c0_4 = arith.constant 0 : index
    %c0_5 = arith.constant 0 : index
    %5 = vector.load %arg3[%c0_4, %c0_5] : memref<128x128xbf16, #tpu.memory_space<vmem>>, vector<128x128xbf16>
    %cst = arith.constant dense<0.000000e+00> : vector<128x128xf32>
    %6 = tpu.matmul %4, %5, %cst {dimension_numbers = #tpu.dot_dimension_numbers<[1], [0], [0], [1], [0, 0, 1, 1], [], []>} : vector<128x128xbf16>, vector<128x128xbf16>, vector<128x128xf32> -> vector<128x128xf32>
    %7 = arith.addf %3, %6 : vector<128x128xf32>
    %c0_6 = arith.constant 0 : index
    %c0_7 = arith.constant 0 : index
    %8 = vector.load %arg7[%c0_6, %c0_7] : memref<128x128xf32, #tpu.memory_space<vmem>>, vector<128x128xf32>
    tpu.vector_store %arg7[%c0_6, %c0_7], %7 {strides = array<i32>} : memref<128x128xf32, #tpu.memory_space<vmem>>, vector<128x128xf32>,
    %c0_i32_8 = arith.constant 0 : i32
    %9 = arith.cmpi eq, %arg1, %c0_i32_8 : i32
    %10 = arith.extui %9 : i1 to i32
    %c0_i32_9 = arith.constant 0 : i32
    %11 = arith.cmpi ne, %10, %c0_i32_9 : i32
    scf.if %11 {
      %c0_10 = arith.constant 0 : index
      %c0_11 = arith.constant 0 : index
      %12 = vector.load %arg7[%c0_10, %c0_11] : memref<128x128xf32, #tpu.memory_space<vmem>>, vector<128x128xf32>
      %c0_12 = arith.constant 0 : index
      %c0_13 = arith.constant 0 : index
      %13 = vector.load %arg4[%c0_12, %c0_13] : memref<128x128xf32, #tpu.memory_space<vmem>>, vector<128x128xf32>
      tpu.vector_store %arg4[%c0_12, %c0_13], %12 {strides = array<i32>} : memref<128x128xf32, #tpu.memory_space<vmem>>, vector<128x128xf32>,
      %cst_14 = arith.constant dense<0.000000e+00> : vector<128xf32>
      %14 = vector.multi_reduction <add>, %12, %cst_14 [0] : vector<128x128xf32> to vector<128xf32>
      %15 = vector.shape_cast %14 : vector<128xf32> to vector<1x128xf32>
      %16 = vector.shape_cast %15 : vector<1x128xf32> to vector<1x1x128xf32>
      %c0_15 = arith.constant 0 : index
      %c0_16 = arith.constant 0 : index
      %c0_17 = arith.constant 0 : index
      %17 = vector.load %arg5[%c0_15, %c0_16, %c0_17] : memref<1x1x128xf32, #tpu.memory_space<vmem>>, vector<1x1x128xf32>
      tpu.vector_store %arg5[%c0_15, %c0_16, %c0_17], %16 {strides = array<i32>} : memref<1x1x128xf32, #tpu.memory_space<vmem>>, vector<1x1x128xf32>,
      %18 = arith.mulf %12, %12 : vector<128x128xf32>
      %cst_18 = arith.constant dense<0.000000e+00> : vector<128xf32>
      %19 = vector.multi_reduction <add>, %18, %cst_18 [0] : vector<128x128xf32> to vector<128xf32>
      %20 = vector.shape_cast %19 : vector<128xf32> to vector<1x128xf32>
      %21 = vector.shape_cast %20 : vector<1x128xf32> to vector<1x1x128xf32>
      %c0_19 = arith.constant 0 : index
      %c0_20 = arith.constant 0 : index
      %c0_21 = arith.constant 0 : index
      %22 = vector.load %arg6[%c0_19, %c0_20, %c0_21] : memref<1x1x128xf32, #tpu.memory_space<vmem>>, vector<1x1x128xf32>
      tpu.vector_store %arg6[%c0_19, %c0_20, %c0_21], %21 {strides = array<i32>} : memref<1x1x128xf32, #tpu.memory_space<vmem>>, vector<1x1x128xf32>,
    } else {
    }
    return
  }
  func.func @transform_0(%arg0: i32, %arg1: i32) -> (i32, i32) {
    %c0_i32 = arith.constant 0 : i32
    return %arg0, %arg1 : i32, i32
  }
  func.func @transform_1(%arg0: i32, %arg1: i32) -> (i32, i32) {
    %c0_i32 = arith.constant 0 : i32
    %c0_i32_0 = arith.constant 0 : i32
    return %arg1, %c0_i32 : i32, i32
  }
  func.func @transform_2(%arg0: i32, %arg1: i32) -> (i32, i32) {
    %c0_i32 = arith.constant 0 : i32
    %c0_i32_0 = arith.constant 0 : i32
    return %arg0, %c0_i32 : i32, i32
  }
  func.func @transform_3(%arg0: i32, %arg1: i32) -> (i32, i32, i32) {
    %c0_i32 = arith.constant 0 : i32
    %c0_i32_0 = arith.constant 0 : i32
    %c0_i32_1 = arith.constant 0 : i32
    return %arg0, %c0_i32, %c0_i32_0 : i32, i32, i32
  }
  func.func @transform_4(%arg0: i32, %arg1: i32) -> (i32, i32, i32) {
    %c0_i32 = arith.constant 0 : i32
    %c0_i32_0 = arith.constant 0 : i32
    %c0_i32_1 = arith.constant 0 : i32
    return %arg0, %c0_i32, %c0_i32_0 : i32, i32, i32
  }
}

module attributes {stable_mosaic.version = 11 : i64} {
  func.func @_bn_epilogue_kernel(%arg0: i32, %arg1: memref<128x128xf32, #tpu.memory_space<vmem>>, %arg2: memref<1x128xf32, #tpu.memory_space<vmem>>, %arg3: memref<1x128xf32, #tpu.memory_space<vmem>>, %arg4: memref<128x128xbf16, #tpu.memory_space<vmem>>) attributes {dimension_semantics = [#tpu.dimension_semantics<parallel>], iteration_bounds = array<i64: 1>, scalar_prefetch = 0 : i64, scratch_operands = 0 : i64, tpu.core_type = #tpu.core_type<tc>, window_params = [{transform_indices = @transform_0, window_bounds = array<i64: 128, 128>}, {pipeline_mode = #tpu.pipeline_mode<synchronous>, transform_indices = @transform_1, window_bounds = array<i64: 1, 128>}, {pipeline_mode = #tpu.pipeline_mode<synchronous>, transform_indices = @transform_2, window_bounds = array<i64: 1, 128>}, {transform_indices = @transform_3, window_bounds = array<i64: 128, 128>}]} {
    %c0 = arith.constant 0 : index
    %c0_0 = arith.constant 0 : index
    %0 = vector.load %arg1[%c0, %c0_0] : memref<128x128xf32, #tpu.memory_space<vmem>>, vector<128x128xf32>
    %c0_1 = arith.constant 0 : index
    %c0_2 = arith.constant 0 : index
    %1 = vector.load %arg2[%c0_1, %c0_2] : memref<1x128xf32, #tpu.memory_space<vmem>>, vector<1x128xf32>
    %2 = vector.broadcast %1 : vector<1x128xf32> to vector<128x128xf32>
    %3 = arith.mulf %0, %2 : vector<128x128xf32>
    %c0_3 = arith.constant 0 : index
    %c0_4 = arith.constant 0 : index
    %4 = vector.load %arg3[%c0_3, %c0_4] : memref<1x128xf32, #tpu.memory_space<vmem>>, vector<1x128xf32>
    %5 = vector.broadcast %4 : vector<1x128xf32> to vector<128x128xf32>
    %6 = arith.addf %3, %5 : vector<128x128xf32>
    %cst = arith.constant 0.000000e+00 : f32
    %7 = vector.broadcast %cst : f32 to vector<128x128xf32>
    %8 = arith.maximumf %6, %7 : vector<128x128xf32>
    %9 = arith.truncf %8 : vector<128x128xf32> to vector<128x128xbf16>
    %c0_5 = arith.constant 0 : index
    %c0_6 = arith.constant 0 : index
    %10 = vector.load %arg4[%c0_5, %c0_6] : memref<128x128xbf16, #tpu.memory_space<vmem>>, vector<128x128xbf16>
    tpu.vector_store %arg4[%c0_5, %c0_6], %9 {strides = array<i32>} : memref<128x128xbf16, #tpu.memory_space<vmem>>, vector<128x128xbf16>,
    return
  }
  func.func @transform_0(%arg0: i32) -> (i32, i32) {
    %c0_i32 = arith.constant 0 : i32
    %c0_i32_0 = arith.constant 0 : i32
    return %arg0, %c0_i32 : i32, i32
  }
  func.func @transform_1(%arg0: i32) -> (i32, i32) {
    %c0_i32 = arith.constant 0 : i32
    %c0_i32_0 = arith.constant 0 : i32
    %c0_i32_1 = arith.constant 0 : i32
    return %c0_i32, %c0_i32_0 : i32, i32
  }
  func.func @transform_2(%arg0: i32) -> (i32, i32) {
    %c0_i32 = arith.constant 0 : i32
    %c0_i32_0 = arith.constant 0 : i32
    %c0_i32_1 = arith.constant 0 : i32
    return %c0_i32, %c0_i32_0 : i32, i32
  }
  func.func @transform_3(%arg0: i32) -> (i32, i32) {
    %c0_i32 = arith.constant 0 : i32
    %c0_i32_0 = arith.constant 0 : i32
    return %arg0, %c0_i32 : i32, i32
  }
}

module attributes {stable_mosaic.version = 11 : i64} {
  func.func @_bn_epilogue_kernel(%arg0: i32, %arg1: memref<128x128xf32, #tpu.memory_space<vmem>>, %arg2: memref<1x128xf32, #tpu.memory_space<vmem>>, %arg3: memref<1x128xf32, #tpu.memory_space<vmem>>, %arg4: memref<128x128xf32, #tpu.memory_space<vmem>>, %arg5: memref<1x128xf32, #tpu.memory_space<vmem>>, %arg6: memref<1x128xf32, #tpu.memory_space<vmem>>, %arg7: memref<128x128xf32, #tpu.memory_space<vmem>>) attributes {dimension_semantics = [#tpu.dimension_semantics<parallel>], iteration_bounds = array<i64: 1>, scalar_prefetch = 0 : i64, scratch_operands = 0 : i64, tpu.core_type = #tpu.core_type<tc>, window_params = [{transform_indices = @transform_0, window_bounds = array<i64: 128, 128>}, {pipeline_mode = #tpu.pipeline_mode<synchronous>, transform_indices = @transform_1, window_bounds = array<i64: 1, 128>}, {pipeline_mode = #tpu.pipeline_mode<synchronous>, transform_indices = @transform_2, window_bounds = array<i64: 1, 128>}, {transform_indices = @transform_3, window_bounds = array<i64: 128, 128>}, {pipeline_mode = #tpu.pipeline_mode<synchronous>, transform_indices = @transform_4, window_bounds = array<i64: 1, 128>}, {pipeline_mode = #tpu.pipeline_mode<synchronous>, transform_indices = @transform_5, window_bounds = array<i64: 1, 128>}, {transform_indices = @transform_6, window_bounds = array<i64: 128, 128>}]} {
    %c0 = arith.constant 0 : index
    %c0_0 = arith.constant 0 : index
    %0 = vector.load %arg1[%c0, %c0_0] : memref<128x128xf32, #tpu.memory_space<vmem>>, vector<128x128xf32>
    %c0_1 = arith.constant 0 : index
    %c0_2 = arith.constant 0 : index
    %1 = vector.load %arg2[%c0_1, %c0_2] : memref<1x128xf32, #tpu.memory_space<vmem>>, vector<1x128xf32>
    %2 = vector.broadcast %1 : vector<1x128xf32> to vector<128x128xf32>
    %3 = arith.mulf %0, %2 : vector<128x128xf32>
    %c0_3 = arith.constant 0 : index
    %c0_4 = arith.constant 0 : index
    %4 = vector.load %arg3[%c0_3, %c0_4] : memref<1x128xf32, #tpu.memory_space<vmem>>, vector<1x128xf32>
    %5 = vector.broadcast %4 : vector<1x128xf32> to vector<128x128xf32>
    %6 = arith.addf %3, %5 : vector<128x128xf32>
    %cst = arith.constant 0.000000e+00 : f32
    %7 = vector.broadcast %cst : f32 to vector<128x128xf32>
    %8 = arith.maximumf %6, %7 : vector<128x128xf32>
    %c0_5 = arith.constant 0 : index
    %c0_6 = arith.constant 0 : index
    %9 = vector.load %arg4[%c0_5, %c0_6] : memref<128x128xf32, #tpu.memory_space<vmem>>, vector<128x128xf32>
    %c0_7 = arith.constant 0 : index
    %c0_8 = arith.constant 0 : index
    %10 = vector.load %arg5[%c0_7, %c0_8] : memref<1x128xf32, #tpu.memory_space<vmem>>, vector<1x128xf32>
    %11 = vector.broadcast %10 : vector<1x128xf32> to vector<128x128xf32>
    %12 = arith.mulf %9, %11 : vector<128x128xf32>
    %c0_9 = arith.constant 0 : index
    %c0_10 = arith.constant 0 : index
    %13 = vector.load %arg6[%c0_9, %c0_10] : memref<1x128xf32, #tpu.memory_space<vmem>>, vector<1x128xf32>
    %14 = vector.broadcast %13 : vector<1x128xf32> to vector<128x128xf32>
    %15 = arith.addf %12, %14 : vector<128x128xf32>
    %16 = arith.addf %8, %15 : vector<128x128xf32>
    %c0_11 = arith.constant 0 : index
    %c0_12 = arith.constant 0 : index
    %17 = vector.load %arg7[%c0_11, %c0_12] : memref<128x128xf32, #tpu.memory_space<vmem>>, vector<128x128xf32>
    tpu.vector_store %arg7[%c0_11, %c0_12], %16 {strides = array<i32>} : memref<128x128xf32, #tpu.memory_space<vmem>>, vector<128x128xf32>,
    return
  }
  func.func @transform_0(%arg0: i32) -> (i32, i32) {
    %c0_i32 = arith.constant 0 : i32
    %c0_i32_0 = arith.constant 0 : i32
    return %arg0, %c0_i32 : i32, i32
  }
  func.func @transform_1(%arg0: i32) -> (i32, i32) {
    %c0_i32 = arith.constant 0 : i32
    %c0_i32_0 = arith.constant 0 : i32
    %c0_i32_1 = arith.constant 0 : i32
    return %c0_i32, %c0_i32_0 : i32, i32
  }
  func.func @transform_2(%arg0: i32) -> (i32, i32) {
    %c0_i32 = arith.constant 0 : i32
    %c0_i32_0 = arith.constant 0 : i32
    %c0_i32_1 = arith.constant 0 : i32
    return %c0_i32, %c0_i32_0 : i32, i32
  }
  func.func @transform_3(%arg0: i32) -> (i32, i32) {
    %c0_i32 = arith.constant 0 : i32
    %c0_i32_0 = arith.constant 0 : i32
    return %arg0, %c0_i32 : i32, i32
  }
  func.func @transform_4(%arg0: i32) -> (i32, i32) {
    %c0_i32 = arith.constant 0 : i32
    %c0_i32_0 = arith.constant 0 : i32
    %c0_i32_1 = arith.constant 0 : i32
    return %c0_i32, %c0_i32_0 : i32, i32
  }
  func.func @transform_5(%arg0: i32) -> (i32, i32) {
    %c0_i32 = arith.constant 0 : i32
    %c0_i32_0 = arith.constant 0 : i32
    %c0_i32_1 = arith.constant 0 : i32
    return %c0_i32, %c0_i32_0 : i32, i32
  }
  func.func @transform_6(%arg0: i32) -> (i32, i32) {
    %c0_i32 = arith.constant 0 : i32
    %c0_i32_0 = arith.constant 0 : i32
    return %arg0, %c0_i32 : i32, i32
  }
}

</mosaic_0001>

<llo_original>
// kernel: resnet_basic_block.6
$region0: #{resnet_basic_block.6}
  #allocation0 [shape = 'u32[]', space=smem, size = 0x4, offset = 0x4, fixed_abs, tag = 'smem constant byte address 0x4 - core index']
  #allocation1 [shape = 'u32[144,128]{1,0:T(1,128)}', space=vmem, size = 0x12000, scoped, tag = 'internal scratch']
  %s0 = inlined_call_operand.vmem [shape: f32[128,128], index: 0, kind: input, shape index: {}]
  %s1 = inlined_call_operand.vmem [shape: f32[1,128], index: 1, kind: input, shape index: {}]
  %s2 = inlined_call_operand.vmem [shape: f32[1,128], index: 2, kind: input, shape index: {}]
  %s3 = inlined_call_operand.vmem [shape: bf16[128,128], index: 3, kind: output, shape index: {}]
  %s4 = sld [smem:[#allocation0]]
  $region22: #{resnet_basic_block.6} parent=0
    _
  %s6 = ssub.s32 1, %s4
  %s7 = scalar_select 0, %s6, %s4
  // Predicated region
  $region2: #{resnet_basic_block.6} parent=0 // pred_check
    _
  $region3: #{resnet_basic_block.6} parent=0 // pred_check_branch
    %9 = sbr.rel (0) target = $region5
  $region4: #{resnet_basic_block.6} parent=0 // pred_region
    _
  $region5: #{resnet_basic_block.6} parent=0 // pred_fallthru
    _
  // Predicated region
  $region6: #{resnet_basic_block.6} parent=0 // pred_check
    _
  $region7: #{resnet_basic_block.6} parent=0 // pred_check_branch
    %11 = sbr.rel (0) target = $region9
  $region8: #{resnet_basic_block.6} parent=0 // pred_region
    _
  $region9: #{resnet_basic_block.6} parent=0 // pred_fallthru
    _
  // Predicated region
  $region10: #{resnet_basic_block.6} parent=0 // pred_check
    _
  $region11: #{resnet_basic_block.6} parent=0 // pred_check_branch
    %13 = sbr.rel (0) target = $region13
  $region12: #{resnet_basic_block.6} parent=0 // pred_region
    _
  $region13: #{resnet_basic_block.6} parent=0 // pred_fallthru
    _
  %v14 = vld [vmem:[%s0] sm:$0xff]
  %v15 = vld [vmem:[%s0 + $0x8] sm:$0xff]
  %v16 = vld [vmem:[%s0 + $0x10] sm:$0xff]
  %v17 = vld [vmem:[%s0 + $0x18] sm:$0xff]
  %v18 = vld [vmem:[%s0 + $0x20] sm:$0xff]
  %v19 = vld [vmem:[%s0 + $0x28] sm:$0xff]
  %v20 = vld [vmem:[%s0 + $0x30] sm:$0xff]
  %v21 = vld [vmem:[%s0 + $0x38] sm:$0xff]
  %v22 = vld [vmem:[%s0 + $0x40] sm:$0xff]
  %v23 = vld [vmem:[%s0 + $0x48] sm:$0xff]
  %v24 = vld [vmem:[%s0 + $0x50] sm:$0xff]
  %v25 = vld [vmem:[%s0 + $0x58] sm:$0xff]
  %v26 = vld [vmem:[%s0 + $0x60] sm:$0xff]
  %v27 = vld [vmem:[%s0 + $0x68] sm:$0xff]
  %v28 = vld [vmem:[%s0 + $0x70] sm:$0xff]
  %v29 = vld [vmem:[%s0 + $0x78] sm:$0xff]
  %v30 = vld [vmem:[%s1] sm:$0x1]
  %v32 = vlaneseq
  %v33 = vshrl.u32 %v32, 7
  %v34 = vsub.s32 0, %v33
  %v35 = vrot.slane %v30, %v34
  %v37 = vmul.f32 %v14, %v35
  %v38 = vmul.f32 %v15, %v35
  %v39 = vmul.f32 %v16, %v35
  %v40 = vmul.f32 %v17, %v35
  %v41 = vmul.f32 %v18, %v35
  %v42 = vmul.f32 %v19, %v35
  %v43 = vmul.f32 %v20, %v35
  %v44 = vmul.f32 %v21, %v35
  %v45 = vmul.f32 %v22, %v35
  %v46 = vmul.f32 %v23, %v35
  %v47 = vmul.f32 %v24, %v35
  %v48 = vmul.f32 %v25, %v35
  %v49 = vmul.f32 %v26, %v35
  %v50 = vmul.f32 %v27, %v35
  %v51 = vmul.f32 %v28, %v35
  %v52 = vmul.f32 %v29, %v35
  %v53 = vld [vmem:[%s2] sm:$0x1]
  %v55 = vlaneseq
  %v56 = vshrl.u32 %v55, 7
  %v57 = vsub.s32 0, %v56
  %v58 = vrot.slane %v53, %v57
  %v60 = vadd.f32 %v37, %v58
  %v61 = vadd.f32 %v38, %v58
  %v62 = vadd.f32 %v39, %v58
  %v63 = vadd.f32 %v40, %v58
  %v64 = vadd.f32 %v41, %v58
  %v65 = vadd.f32 %v42, %v58
  %v66 = vadd.f32 %v43, %v58
  %v67 = vadd.f32 %v44, %v58
  %v68 = vadd.f32 %v45, %v58
  %v69 = vadd.f32 %v46, %v58
  %v70 = vadd.f32 %v47, %v58
  %v71 = vadd.f32 %v48, %v58
  %v72 = vadd.f32 %v49, %v58
  %v73 = vadd.f32 %v50, %v58
  %v74 = vadd.f32 %v51, %v58
  %v75 = vadd.f32 %v52, %v58
  %v76 = vmax.f32 %v60, 0.0
  %v77 = vmax.f32 %v61, 0.0
  %v78 = vmax.f32 %v62, 0.0
  %v79 = vmax.f32 %v63, 0.0
  %v80 = vmax.f32 %v64, 0.0
  %v81 = vmax.f32 %v65, 0.0
  %v82 = vmax.f32 %v66, 0.0
  %v83 = vmax.f32 %v67, 0.0
  %v84 = vmax.f32 %v68, 0.0
  %v85 = vmax.f32 %v69, 0.0
  %v86 = vmax.f32 %v70, 0.0
  %v87 = vmax.f32 %v71, 0.0
  %v88 = vmax.f32 %v72, 0.0
  %v89 = vmax.f32 %v73, 0.0
  %v90 = vmax.f32 %v74, 0.0
  %v91 = vmax.f32 %v75, 0.0
  %v92 = vpack.c.bf16 %v77, %v76
  %v93 = vpack.c.bf16 %v79, %v78
  %v94 = vpack.c.bf16 %v81, %v80
  %v95 = vpack.c.bf16 %v83, %v82
  %v96 = vpack.c.bf16 %v85, %v84
  %v97 = vpack.c.bf16 %v87, %v86
  %v98 = vpack.c.bf16 %v89, %v88
  %v99 = vpack.c.bf16 %v91, %v90
  %v108 = vunpack.c.l.b16 %v92
  %v109 = vunpack.c.h.b16 %v92
  %v110 = vunpack.c.l.b16 %v93
  %v111 = vunpack.c.h.b16 %v93
  %v112 = vunpack.c.l.b16 %v94
  %v113 = vunpack.c.h.b16 %v94
  %v114 = vunpack.c.l.b16 %v95
  %v115 = vunpack.c.h.b16 %v95
  %v116 = vunpack.c.l.b16 %v96
  %v117 = vunpack.c.h.b16 %v96
  %v118 = vunpack.c.l.b16 %v97
  %v119 = vunpack.c.h.b16 %v97
  %v120 = vunpack.c.l.b16 %v98
  %v121 = vunpack.c.h.b16 %v98
  %v122 = vunpack.c.l.b16 %v99
  %v123 = vunpack.c.h.b16 %v99
  %v124 = vpack.c.b16 %v108, %v108
  %v125 = vpack.c.b16 %v109, %v109
  %v126 = vpack.c.b16 %v110, %v110
  %v127 = vpack.c.b16 %v111, %v111
  %v128 = vpack.c.b16 %v112, %v112
  %v129 = vpack.c.b16 %v113, %v113
  %v130 = vpack.c.b16 %v114, %v114
  %v131 = vpack.c.b16 %v115, %v115
  %v132 = vpack.c.b16 %v116, %v116
  %v133 = vpack.c.b16 %v117, %v117
  %v134 = vpack.c.b16 %v118, %v118
  %v135 = vpack.c.b16 %v119, %v119
  %v136 = vpack.c.b16 %v120, %v120
  %v137 = vpack.c.b16 %v121, %v121
  %v138 = vpack.c.b16 %v122, %v122
  %v139 = vpack.c.b16 %v123, %v123
  %156 = vst [vmem:[%s3] sm:$0xf] %v124
  %157 = vst [vmem:[%s3 + $0x4] sm:$0xf] %v125
  %158 = vst [vmem:[%s3 + $0x8] sm:$0xf] %v126
  %159 = vst [vmem:[%s3 + $0xc] sm:$0xf] %v127
  %160 = vst [vmem:[%s3 + $0x10] sm:$0xf] %v128
  %161 = vst [vmem:[%s3 + $0x14] sm:$0xf] %v129
  %162 = vst [vmem:[%s3 + $0x18] sm:$0xf] %v130
  %163 = vst [vmem:[%s3 + $0x1c] sm:$0xf] %v131
  %164 = vst [vmem:[%s3 + $0x20] sm:$0xf] %v132
  %165 = vst [vmem:[%s3 + $0x24] sm:$0xf] %v133
  %166 = vst [vmem:[%s3 + $0x28] sm:$0xf] %v134
  %167 = vst [vmem:[%s3 + $0x2c] sm:$0xf] %v135
  %168 = vst [vmem:[%s3 + $0x30] sm:$0xf] %v136
  %169 = vst [vmem:[%s3 + $0x34] sm:$0xf] %v137
  %170 = vst [vmem:[%s3 + $0x38] sm:$0xf] %v138
  %171 = vst [vmem:[%s3 + $0x3c] sm:$0xf] %v139
  // Predicated region
  $region14: #{resnet_basic_block.6} parent=0 // pred_check
    _
  $region15: #{resnet_basic_block.6} parent=0 // pred_check_branch
    %173 = sbr.rel (0) target = $region17
  $region16: #{resnet_basic_block.6} parent=0 // pred_region
    _
  $region17: #{resnet_basic_block.6} parent=0 // pred_fallthru
    _
  // Predicated region
  $region18: #{resnet_basic_block.6} parent=0 // pred_check
    _
  $region19: #{resnet_basic_block.6} parent=0 // pred_check_branch
    %175 = sbr.rel (0) target = $region21
  $region20: #{resnet_basic_block.6} parent=0 // pred_region
    _
  $region21: #{resnet_basic_block.6} parent=0 // pred_fallthru
    _

// kernel: resnet_basic_block.5
$region0: #{resnet_basic_block.5}
  #allocation0 [shape = 'u32[]', space=smem, size = 0x4, offset = 0x4, fixed_abs, tag = 'smem constant byte address 0x4 - core index']
  #allocation1 [shape = 'u32[144,128]{1,0:T(1,128)}', space=vmem, size = 0x12000, scoped, tag = 'internal scratch']
  #allocation2 [shape = 'f32[128,128]{1,0:T(8,128)}', space=vmem, size = 0x10000, scoped, tag = 'scratch operand']
  %s0 = inlined_call_operand.vmem [shape: bf16[128,128], index: 0, kind: input, shape index: {}]
  %s1 = inlined_call_operand.vmem [shape: bf16[128,128], index: 1, kind: input, shape index: {}]
  %s2 = inlined_call_operand.vmem [shape: f32[128,128], index: 2, kind: output, shape index: {0}]
  %s3 = inlined_call_operand.vmem [shape: f32[1,1,128], index: 3, kind: output, shape index: {1}]
  %s4 = inlined_call_operand.vmem [shape: f32[1,1,128], index: 4, kind: output, shape index: {2}]
  %5 = xla_tuple %s2, %s3, %s4
  %s6 = sld [smem:[#allocation0]]
  $region42: #{resnet_basic_block.5} parent=0
    _
  %s8 = ssub.s32 1, %s6
  %s9 = scalar_select 0, %s8, %s6
  // Predicated region
  $region2: #{resnet_basic_block.5} parent=0 // pred_check
    _
  $region3: #{resnet_basic_block.5} parent=0 // pred_check_branch
    %11 = sbr.rel (0) target = $region5
  $region4: #{resnet_basic_block.5} parent=0 // pred_region
    _
  $region5: #{resnet_basic_block.5} parent=0 // pred_fallthru
    _
  // Predicated region
  $region6: #{resnet_basic_block.5} parent=0 // pred_check
    _
  $region7: #{resnet_basic_block.5} parent=0 // pred_check_branch
    %13 = sbr.rel (0) target = $region9
  $region8: #{resnet_basic_block.5} parent=0 // pred_region
    _
  $region9: #{resnet_basic_block.5} parent=0 // pred_fallthru
    _
  %p15 = scmp.eq.s32.totalorder 0, 0
  // Predicated region
  $region10: #{resnet_basic_block.5} parent=0 // pred_check
    %p16 = pneg %p15
  $region11: #{resnet_basic_block.5} parent=0 // pred_check_branch
    %18 = sbr.rel (%p16) target = $region13
  $region12: #{resnet_basic_block.5} parent=0 // pred_region
    %19 = vst [vmem:[#allocation2] sm:$0xff] 0.0
    %20 = vst [vmem:[#allocation2 + $0x8] sm:$0xff] 0.0
    %21 = vst [vmem:[#allocation2 + $0x10] sm:$0xff] 0.0
    %22 = vst [vmem:[#allocation2 + $0x18] sm:$0xff] 0.0
    %23 = vst [vmem:[#allocation2 + $0x20] sm:$0xff] 0.0
    %24 = vst [vmem:[#allocation2 + $0x28] sm:$0xff] 0.0
    %25 = vst [vmem:[#allocation2 + $0x30] sm:$0xff] 0.0
    %26 = vst [vmem:[#allocation2 + $0x38] sm:$0xff] 0.0
    %27 = vst [vmem:[#allocation2 + $0x40] sm:$0xff] 0.0
    %28 = vst [vmem:[#allocation2 + $0x48] sm:$0xff] 0.0
    %29 = vst [vmem:[#allocation2 + $0x50] sm:$0xff] 0.0
    %30 = vst [vmem:[#allocation2 + $0x58] sm:$0xff] 0.0
    %31 = vst [vmem:[#allocation2 + $0x60] sm:$0xff] 0.0
    %32 = vst [vmem:[#allocation2 + $0x68] sm:$0xff] 0.0
    %33 = vst [vmem:[#allocation2 + $0x70] sm:$0xff] 0.0
    %34 = vst [vmem:[#allocation2 + $0x78] sm:$0xff] 0.0
  $region13: #{resnet_basic_block.5} parent=0 // pred_fallthru
    _
  %v35 = vld [vmem:[#allocation2] sm:$0xff]
  %v36 = vld [vmem:[#allocation2 + $0x8] sm:$0xff]
  %v37 = vld [vmem:[#allocation2 + $0x10] sm:$0xff]
  %v38 = vld [vmem:[#allocation2 + $0x18] sm:$0xff]
  %v39 = vld [vmem:[#allocation2 + $0x20] sm:$0xff]
  %v40 = vld [vmem:[#allocation2 + $0x28] sm:$0xff]
  %v41 = vld [vmem:[#allocation2 + $0x30] sm:$0xff]
  %v42 = vld [vmem:[#allocation2 + $0x38] sm:$0xff]
  %v43 = vld [vmem:[#allocation2 + $0x40] sm:$0xff]
  %v44 = vld [vmem:[#allocation2 + $0x48] sm:$0xff]
  %v45 = vld [vmem:[#allocation2 + $0x50] sm:$0xff]
  %v46 = vld [vmem:[#allocation2 + $0x58] sm:$0xff]
  %v47 = vld [vmem:[#allocation2 + $0x60] sm:$0xff]
  %v48 = vld [vmem:[#allocation2 + $0x68] sm:$0xff]
  %v49 = vld [vmem:[#allocation2 + $0x70] sm:$0xff]
  %v50 = vld [vmem:[#allocation2 + $0x78] sm:$0xff]
  %v51 = vld [vmem:[%s0] sm:$0xf]
  %v52 = vld [vmem:[%s0 + $0x4] sm:$0xf]
  %v53 = vld [vmem:[%s0 + $0x8] sm:$0xf]
  %v54 = vld [vmem:[%s0 + $0xc] sm:$0xf]
  %v55 = vld [vmem:[%s0 + $0x10] sm:$0xf]
  %v56 = vld [vmem:[%s0 + $0x14] sm:$0xf]
  %v57 = vld [vmem:[%s0 + $0x18] sm:$0xf]
  %v58 = vld [vmem:[%s0 + $0x1c] sm:$0xf]
  %v59 = vld [vmem:[%s0 + $0x20] sm:$0xf]
  %v60 = vld [vmem:[%s0 + $0x24] sm:$0xf]
  %v61 = vld [vmem:[%s0 + $0x28] sm:$0xf]
  %v62 = vld [vmem:[%s0 + $0x2c] sm:$0xf]
  %v63 = vld [vmem:[%s0 + $0x30] sm:$0xf]
  %v64 = vld [vmem:[%s0 + $0x34] sm:$0xf]
  %v65 = vld [vmem:[%s0 + $0x38] sm:$0xf]
  %v66 = vld [vmem:[%s0 + $0x3c] sm:$0xf]
  %v67 = vld [vmem:[%s1] sm:$0xf]
  %v68 = vld [vmem:[%s1 + $0x4] sm:$0xf]
  %v69 = vld [vmem:[%s1 + $0x8] sm:$0xf]
  %v70 = vld [vmem:[%s1 + $0xc] sm:$0xf]
  %v71 = vld [vmem:[%s1 + $0x10] sm:$0xf]
  %v72 = vld [vmem:[%s1 + $0x14] sm:$0xf]
  %v73 = vld [vmem:[%s1 + $0x18] sm:$0xf]
  %v74 = vld [vmem:[%s1 + $0x1c] sm:$0xf]
  %v75 = vld [vmem:[%s1 + $0x20] sm:$0xf]
  %v76 = vld [vmem:[%s1 + $0x24] sm:$0xf]
  %v77 = vld [vmem:[%s1 + $0x28] sm:$0xf]
  %v78 = vld [vmem:[%s1 + $0x2c] sm:$0xf]
  %v79 = vld [vmem:[%s1 + $0x30] sm:$0xf]
  %v80 = vld [vmem:[%s1 + $0x34] sm:$0xf]
  %v81 = vld [vmem:[%s1 + $0x38] sm:$0xf]
  %v82 = vld [vmem:[%s1 + $0x3c] sm:$0xf]
  %v99 = vunpack.c.l.b16 %v51
  %v100 = vunpack.c.l.b16 %v52
  %v101 = vunpack.c.l.b16 %v53
  %v102 = vunpack.c.l.b16 %v54
  %v103 = vunpack.c.l.b16 %v55
  %v104 = vunpack.c.l.b16 %v56
  %v105 = vunpack.c.l.b16 %v57
  %v106 = vunpack.c.l.b16 %v58
  %v107 = vunpack.c.l.b16 %v59
  %v108 = vunpack.c.l.b16 %v60
  %v109 = vunpack.c.l.b16 %v61
  %v110 = vunpack.c.l.b16 %v62
  %v111 = vunpack.c.l.b16 %v63
  %v112 = vunpack.c.l.b16 %v64
  %v113 = vunpack.c.l.b16 %v65
  %v114 = vunpack.c.l.b16 %v66
  %v115 = vpack.c.b16 %v100, %v99
  %v116 = vpack.c.b16 %v102, %v101
  %v117 = vpack.c.b16 %v104, %v103
  %v118 = vpack.c.b16 %v106, %v105
  %v119 = vpack.c.b16 %v108, %v107
  %v120 = vpack.c.b16 %v110, %v109
  %v121 = vpack.c.b16 %v112, %v111
  %v122 = vpack.c.b16 %v114, %v113
  %v147 = vunpack.c.l.b16 %v67
  %v148 = vunpack.c.l.b16 %v68
  %v149 = vunpack.c.l.b16 %v69
  %v150 = vunpack.c.l.b16 %v70
  %v151 = vunpack.c.l.b16 %v71
  %v152 = vunpack.c.l.b16 %v72
  %v153 = vunpack.c.l.b16 %v73
  %v154 = vunpack.c.l.b16 %v74
  %v155 = vunpack.c.l.b16 %v75
  %v156 = vunpack.c.l.b16 %v76
  %v157 = vunpack.c.l.b16 %v77
  %v158 = vunpack.c.l.b16 %v78
  %v159 = vunpack.c.l.b16 %v79
  %v160 = vunpack.c.l.b16 %v80
  %v161 = vunpack.c.l.b16 %v81
  %v162 = vunpack.c.l.b16 %v82
  %v163 = vpack.c.b16 %v148, %v147
  %v164 = vpack.c.b16 %v150, %v149
  %v165 = vpack.c.b16 %v152, %v151
  %v166 = vpack.c.b16 %v154, %v153
  %v167 = vpack.c.b16 %v156, %v155
  %v168 = vpack.c.b16 %v158, %v157
  %v169 = vpack.c.b16 %v160, %v159
  %v170 = vpack.c.b16 %v162, %v161
  %179 = vmatprep.subr.bf16.mxu0 0
  %180 = vmatpush1.bf16.msra.mxu0 %v163
  %181 = vmatprep.subr.bf16.mxu0 0
  %182 = vmatpush1.bf16.msra.mxu0 %v164
  %183 = vmatprep.subr.bf16.mxu0 0
  %184 = vmatpush1.bf16.msra.mxu0 %v165
  %185 = vmatprep.subr.bf16.mxu0 0
  %186 = vmatpush1.bf16.msra.mxu0 %v166
  %187 = vmatprep.subr.bf16.mxu0 0
  %188 = vmatpush1.bf16.msra.mxu0 %v167
  %189 = vmatprep.subr.bf16.mxu0 0
  %190 = vmatpush1.bf16.msra.mxu0 %v168
  %191 = vmatprep.subr.bf16.mxu0 0
  %192 = vmatpush1.bf16.msra.mxu0 %v169
  %193 = vmatprep.subr.bf16.mxu0 0
  %194 = vmatpush1.bf16.msra.mxu0 %v170
  %195 = vmatprep.subr.bf16.mxu0 0
  %196 = vmatpush1.bf16.msra.mxu0 0
  %197 = vmatprep.subr.bf16.mxu0 0
  %198 = vmatpush1.bf16.msra.mxu0 0
  %199 = vmatprep.subr.bf16.mxu0 0
  %200 = vmatpush1.bf16.msra.mxu0 0
  %201 = vmatprep.subr.bf16.mxu0 0
  %202 = vmatpush1.bf16.msra.mxu0 0
  %203 = vmatprep.subr.bf16.mxu0 0
  %204 = vmatpush1.bf16.msra.mxu0 0
  %205 = vmatprep.subr.bf16.mxu0 0
  %206 = vmatpush1.bf16.msra.mxu0 0
  %207 = vmatprep.subr.bf16.mxu0 0
  %208 = vmatpush1.bf16.msra.mxu0 0
  %209 = vmatprep.subr.bf16.mxu0 0
  %210 = vmatpush1.bf16.msra.mxu0 0
  %211 = vmatprep.mubr.bf16.mxu0 0
  %212 = vmatmul.mubr.bf16.gmra.mrb[0].mxu0 %v115
  %v213 = vpop.f32.mrb[0].mxu0
  %v214 = vadd.f32 0.0, %v213
  %v215 = vpop.f32.mrb[0].mxu0
  %v216 = vpop.f32.mrb[0].mxu0
  %v217 = vadd.f32 0.0, %v216
  %v218 = vpop.f32.mrb[0].mxu0
  %219 = vmatprep.mubr.bf16.mxu0 0
  %220 = vmatmul.mubr.bf16.gmra.mrb[0].mxu0 %v116
  %v221 = vpop.f32.mrb[0].mxu0
  %v222 = vadd.f32 0.0, %v221
  %v223 = vpop.f32.mrb[0].mxu0
  %v224 = vpop.f32.mrb[0].mxu0
  %v225 = vadd.f32 0.0, %v224
  %v226 = vpop.f32.mrb[0].mxu0
  %227 = vmatprep.mubr.bf16.mxu0 0
  %228 = vmatmul.mubr.bf16.gmra.mrb[0].mxu0 %v117
  %v229 = vpop.f32.mrb[0].mxu0
  %v230 = vadd.f32 0.0, %v229
  %v231 = vpop.f32.mrb[0].mxu0
  %v232 = vpop.f32.mrb[0].mxu0
  %v233 = vadd.f32 0.0, %v232
  %v234 = vpop.f32.mrb[0].mxu0
  %235 = vmatprep.mubr.bf16.mxu0 0
  %236 = vmatmul.mubr.bf16.gmra.mrb[0].mxu0 %v118
  %v237 = vpop.f32.mrb[0].mxu0
  %v238 = vadd.f32 0.0, %v237
  %v239 = vpop.f32.mrb[0].mxu0
  %v240 = vpop.f32.mrb[0].mxu0
  %v241 = vadd.f32 0.0, %v240
  %v242 = vpop.f32.mrb[0].mxu0
  %243 = vmatprep.mubr.bf16.mxu0 0
  %244 = vmatmul.mubr.bf16.gmra.mrb[0].mxu0 %v119
  %v245 = vpop.f32.mrb[0].mxu0
  %v246 = vadd.f32 0.0, %v245
  %v247 = vpop.f32.mrb[0].mxu0
  %v248 = vpop.f32.mrb[0].mxu0
  %v249 = vadd.f32 0.0, %v248
  %v250 = vpop.f32.mrb[0].mxu0
  %251 = vmatprep.mubr.bf16.mxu0 0
  %252 = vmatmul.mubr.bf16.gmra.mrb[0].mxu0 %v120
  %v253 = vpop.f32.mrb[0].mxu0
  %v254 = vadd.f32 0.0, %v253
  %v255 = vpop.f32.mrb[0].mxu0
  %v256 = vpop.f32.mrb[0].mxu0
  %v257 = vadd.f32 0.0, %v256
  %v258 = vpop.f32.mrb[0].mxu0
  %259 = vmatprep.mubr.bf16.mxu0 0
  %260 = vmatmul.mubr.bf16.gmra.mrb[0].mxu0 %v121
  %v261 = vpop.f32.mrb[0].mxu0
  %v262 = vadd.f32 0.0, %v261
  %v263 = vpop.f32.mrb[0].mxu0
  %v264 = vpop.f32.mrb[0].mxu0
  %v265 = vadd.f32 0.0, %v264
  %v266 = vpop.f32.mrb[0].mxu0
  %267 = vmatprep.mubr.bf16.mxu0 0
  %268 = vmatmul.mubr.bf16.gmra.mrb[0].mxu0 %v122
  %v269 = vpop.f32.mrb[0].mxu0
  %v270 = vadd.f32 0.0, %v269
  %v271 = vpop.f32.mrb[0].mxu0
  %v272 = vpop.f32.mrb[0].mxu0
  %v273 = vadd.f32 0.0, %v272
  %v274 = vpop.f32.mrb[0].mxu0
  %275 = vdwg.mxu0
  %v276 = vadd.f32 %v35, %v214
  %v277 = vadd.f32 %v36, %v217
  %v278 = vadd.f32 %v37, %v222
  %v279 = vadd.f32 %v38, %v225
  %v280 = vadd.f32 %v39, %v230
  %v281 = vadd.f32 %v40, %v233
  %v282 = vadd.f32 %v41, %v238
  %v283 = vadd.f32 %v42, %v241
  %v284 = vadd.f32 %v43, %v246
  %v285 = vadd.f32 %v44, %v249
  %v286 = vadd.f32 %v45, %v254
  %v287 = vadd.f32 %v46, %v257
  %v288 = vadd.f32 %v47, %v262
  %v289 = vadd.f32 %v48, %v265
  %v290 = vadd.f32 %v49, %v270
  %v291 = vadd.f32 %v50, %v273
  %292 = vst [vmem:[#allocation2] sm:$0xff] %v276
  %293 = vst [vmem:[#allocation2 + $0x8] sm:$0xff] %v277
  %294 = vst [vmem:[#allocation2 + $0x10] sm:$0xff] %v278
  %295 = vst [vmem:[#allocation2 + $0x18] sm:$0xff] %v279
  %296 = vst [vmem:[#allocation2 + $0x20] sm:$0xff] %v280
  %297 = vst [vmem:[#allocation2 + $0x28] sm:$0xff] %v281
  %298 = vst [vmem:[#allocation2 + $0x30] sm:$0xff] %v282
  %299 = vst [vmem:[#allocation2 + $0x38] sm:$0xff] %v283
  %300 = vst [vmem:[#allocation2 + $0x40] sm:$0xff] %v284
  %301 = vst [vmem:[#allocation2 + $0x48] sm:$0xff] %v285
  %302 = vst [vmem:[#allocation2 + $0x50] sm:$0xff] %v286
  %303 = vst [vmem:[#allocation2 + $0x58] sm:$0xff] %v287
  %304 = vst [vmem:[#allocation2 + $0x60] sm:$0xff] %v288
  %305 = vst [vmem:[#allocation2 + $0x68] sm:$0xff] %v289
  %306 = vst [vmem:[#allocation2 + $0x70] sm:$0xff] %v290
  %307 = vst [vmem:[#allocation2 + $0x78] sm:$0xff] %v291
  // Predicated region
  $region14: #{resnet_basic_block.5} parent=0 // pred_check
    %p308 = pneg %p15
  $region15: #{resnet_basic_block.5} parent=0 // pred_check_branch
    %310 = sbr.rel (%p308) target = $region17
  $region16: #{resnet_basic_block.5} parent=0 // pred_region
    %v311 = vld [vmem:[#allocation2] sm:$0xff]
    %v312 = vld [vmem:[#allocation2 + $0x8] sm:$0xff]
    %v313 = vld [vmem:[#allocation2 + $0x10] sm:$0xff]
    %v314 = vld [vmem:[#allocation2 + $0x18] sm:$0xff]
    %v315 = vld [vmem:[#allocation2 + $0x20] sm:$0xff]
    %v316 = vld [vmem:[#allocation2 + $0x28] sm:$0xff]
    %v317 = vld [vmem:[#allocation2 + $0x30] sm:$0xff]
    %v318 = vld [vmem:[#allocation2 + $0x38] sm:$0xff]
    %v319 = vld [vmem:[#allocation2 + $0x40] sm:$0xff]
    %v320 = vld [vmem:[#allocation2 + $0x48] sm:$0xff]
    %v321 = vld [vmem:[#allocation2 + $0x50] sm:$0xff]
    %v322 = vld [vmem:[#allocation2 + $0x58] sm:$0xff]
    %v323 = vld [vmem:[#allocation2 + $0x60] sm:$0xff]
    %v324 = vld [vmem:[#allocation2 + $0x68] sm:$0xff]
    %v325 = vld [vmem:[#allocation2 + $0x70] sm:$0xff]
    %v326 = vld [vmem:[#allocation2 + $0x78] sm:$0xff]
    %327 = vst [vmem:[%s2] sm:$0xff] %v311
    %328 = vst [vmem:[%s2 + $0x8] sm:$0xff] %v312
    %329 = vst [vmem:[%s2 + $0x10] sm:$0xff] %v313
    %330 = vst [vmem:[%s2 + $0x18] sm:$0xff] %v314
    %331 = vst [vmem:[%s2 + $0x20] sm:$0xff] %v315
    %332 = vst [vmem:[%s2 + $0x28] sm:$0xff] %v316
    %333 = vst [vmem:[%s2 + $0x30] sm:$0xff] %v317
    %334 = vst [vmem:[%s2 + $0x38] sm:$0xff] %v318
    %335 = vst [vmem:[%s2 + $0x40] sm:$0xff] %v319
    %336 = vst [vmem:[%s2 + $0x48] sm:$0xff] %v320
    %337 = vst [vmem:[%s2 + $0x50] sm:$0xff] %v321
    %338 = vst [vmem:[%s2 + $0x58] sm:$0xff] %v322
    %339 = vst [vmem:[%s2 + $0x60] sm:$0xff] %v323
    %340 = vst [vmem:[%s2 + $0x68] sm:$0xff] %v324
    %341 = vst [vmem:[%s2 + $0x70] sm:$0xff] %v325
    %342 = vst [vmem:[%s2 + $0x78] sm:$0xff] %v326
    %v343 = vadd.f32 %v311, %v312
    %v344 = vadd.f32 %v343, %v313
    %v345 = vadd.f32 %v344, %v314
    %v346 = vadd.f32 %v345, %v315
    %v347 = vadd.f32 %v346, %v316
    %v348 = vadd.f32 %v347, %v317
    %v349 = vadd.f32 %v348, %v318
    %v350 = vadd.f32 %v349, %v319
    %v351 = vadd.f32 %v350, %v320
    %v352 = vadd.f32 %v351, %v321
    %v353 = vadd.f32 %v352, %v322
    %v354 = vadd.f32 %v353, %v323
    %v355 = vadd.f32 %v354, %v324
    %v356 = vadd.f32 %v355, %v325
    %v357 = vadd.f32 %v356, %v326
    %v358 = vrot.slane %v357, 4
    %v359 = vadd.f32 %v357, %v358
    %v360 = vrot.slane %v359, 2
    %v361 = vadd.f32 %v359, %v360
    %v362 = vrot.slane %v361, 1
    %v363 = vadd.f32 %v361, %v362
    %364 = vst [vmem:[%s3] sm:$0x1] %v363
    %v365 = vmul.f32 %v311, %v311
    %v366 = vmul.f32 %v312, %v312
    %v367 = vmul.f32 %v313, %v313
    %v368 = vmul.f32 %v314, %v314
    %v369 = vmul.f32 %v315, %v315
    %v370 = vmul.f32 %v316, %v316
    %v371 = vmul.f32 %v317, %v317
    %v372 = vmul.f32 %v318, %v318
    %v373 = vmul.f32 %v319, %v319
    %v374 = vmul.f32 %v320, %v320
    %v375 = vmul.f32 %v321, %v321
    %v376 = vmul.f32 %v322, %v322
    %v377 = vmul.f32 %v323, %v323
    %v378 = vmul.f32 %v324, %v324
    %v379 = vmul.f32 %v325, %v325
    %v380 = vmul.f32 %v326, %v326
    %v381 = vadd.f32 %v365, %v366
    %v382 = vadd.f32 %v381, %v367
    %v383 = vadd.f32 %v382, %v368
    %v384 = vadd.f32 %v383, %v369
    %v385 = vadd.f32 %v384, %v370
    %v386 = vadd.f32 %v385, %v371
    %v387 = vadd.f32 %v386, %v372
    %v388 = vadd.f32 %v387, %v373
    %v389 = vadd.f32 %v388, %v374
    %v390 = vadd.f32 %v389, %v375
    %v391 = vadd.f32 %v390, %v376
    %v392 = vadd.f32 %v391, %v377
    %v393 = vadd.f32 %v392, %v378
    %v394 = vadd.f32 %v393, %v379
    %v395 = vadd.f32 %v394, %v380
    %v396 = vrot.slane %v395, 4
    %v397 = vadd.f32 %v395, %v396
    %v398 = vrot.slane %v397, 2
    %v399 = vadd.f32 %v397, %v398
    %v400 = vrot.slane %v399, 1
    %v401 = vadd.f32 %v399, %v400
    %402 = vst [vmem:[%s4] sm:$0x1] %v401
  $region17: #{resnet_basic_block.5} parent=0 // pred_fallthru
    _
  // Predicated region
  $region18: #{resnet_basic_block.5} parent=0 // pred_check
    _
  $region19: #{resnet_basic_block.5} parent=0 // pred_check_branch
    %404 = sbr.rel (0) target = $region21
  $region20: #{resnet_basic_block.5} parent=0 // pred_region
    _
  $region21: #{resnet_basic_block.5} parent=0 // pred_fallthru
    _
  // Predicated region
  $region22: #{resnet_basic_block.5} parent=0 // pred_check
    _
  $region23: #{resnet_basic_block.5} parent=0 // pred_check_branch
    %406 = sbr.rel (0) target = $region25
  $region24: #{resnet_basic_block.5} parent=0 // pred_region
    _
  $region25: #{resnet_basic_block.5} parent=0 // pred_fallthru
    _
  // Predicated region
  $region26: #{resnet_basic_block.5} parent=0 // pred_check
    _
  $region27: #{resnet_basic_block.5} parent=0 // pred_check_branch
    %408 = sbr.rel (0) target = $region29
  $region28: #{resnet_basic_block.5} parent=0 // pred_region
    _
  $region29: #{resnet_basic_block.5} parent=0 // pred_fallthru
    _
  // Predicated region
  $region30: #{resnet_basic_block.5} parent=0 // pred_check
    _
  $region31: #{resnet_basic_block.5} parent=0 // pred_check_branch
    %410 = sbr.rel (0) target = $region33
  $region32: #{resnet_basic_block.5} parent=0 // pred_region
    _
  $region33: #{resnet_basic_block.5} parent=0 // pred_fallthru
    _
  // Predicated region
  $region34: #{resnet_basic_block.5} parent=0 // pred_check
    _
  $region35: #{resnet_basic_block.5} parent=0 // pred_check_branch
    %412 = sbr.rel (0) target = $region37
  $region36: #{resnet_basic_block.5} parent=0 // pred_region
    _
  $region37: #{resnet_basic_block.5} parent=0 // pred_fallthru
    _
  // Predicated region
  $region38: #{resnet_basic_block.5} parent=0 // pred_check
    _
  $region39: #{resnet_basic_block.5} parent=0 // pred_check_branch
    %414 = sbr.rel (0) target = $region41
  $region40: #{resnet_basic_block.5} parent=0 // pred_region
    _
  $region41: #{resnet_basic_block.5} parent=0 // pred_fallthru
    _

// kernel: resnet_basic_block.9
$region0: #{resnet_basic_block.9}
  #allocation0 [shape = 'u32[]', space=smem, size = 0x4, offset = 0x4, fixed_abs, tag = 'smem constant byte address 0x4 - core index']
  #allocation1 [shape = 'u32[144,128]{1,0:T(1,128)}', space=vmem, size = 0x12000, scoped, tag = 'internal scratch']
  %s0 = inlined_call_operand.vmem [shape: f32[128,128], index: 0, kind: input, shape index: {}]
  %s1 = inlined_call_operand.vmem [shape: f32[1,128], index: 1, kind: input, shape index: {}]
  %s2 = inlined_call_operand.vmem [shape: f32[1,128], index: 2, kind: input, shape index: {}]
  %s3 = inlined_call_operand.vmem [shape: f32[128,128], index: 3, kind: input, shape index: {}]
  %s4 = inlined_call_operand.vmem [shape: f32[1,128], index: 4, kind: input, shape index: {}]
  %s5 = inlined_call_operand.vmem [shape: f32[1,128], index: 5, kind: input, shape index: {}]
  %s6 = inlined_call_operand.vmem [shape: f32[128,128], index: 6, kind: output, shape index: {}]
  %s7 = sld [smem:[#allocation0]]
  $region34: #{resnet_basic_block.9} parent=0
    _
  %s9 = ssub.s32 1, %s7
  %s10 = scalar_select 0, %s9, %s7
  // Predicated region
  $region2: #{resnet_basic_block.9} parent=0 // pred_check
    _
  $region3: #{resnet_basic_block.9} parent=0 // pred_check_branch
    %12 = sbr.rel (0) target = $region5
  $region4: #{resnet_basic_block.9} parent=0 // pred_region
    _
  $region5: #{resnet_basic_block.9} parent=0 // pred_fallthru
    _
  // Predicated region
  $region6: #{resnet_basic_block.9} parent=0 // pred_check
    _
  $region7: #{resnet_basic_block.9} parent=0 // pred_check_branch
    %14 = sbr.rel (0) target = $region9
  $region8: #{resnet_basic_block.9} parent=0 // pred_region
    _
  $region9: #{resnet_basic_block.9} parent=0 // pred_fallthru
    _
  // Predicated region
  $region10: #{resnet_basic_block.9} parent=0 // pred_check
    _
  $region11: #{resnet_basic_block.9} parent=0 // pred_check_branch
    %16 = sbr.rel (0) target = $region13
  $region12: #{resnet_basic_block.9} parent=0 // pred_region
    _
  $region13: #{resnet_basic_block.9} parent=0 // pred_fallthru
    _
  // Predicated region
  $region14: #{resnet_basic_block.9} parent=0 // pred_check
    _
  $region15: #{resnet_basic_block.9} parent=0 // pred_check_branch
    %18 = sbr.rel (0) target = $region17
  $region16: #{resnet_basic_block.9} parent=0 // pred_region
    _
  $region17: #{resnet_basic_block.9} parent=0 // pred_fallthru
    _
  // Predicated region
  $region18: #{resnet_basic_block.9} parent=0 // pred_check
    _
  $region19: #{resnet_basic_block.9} parent=0 // pred_check_branch
    %20 = sbr.rel (0) target = $region21
  $region20: #{resnet_basic_block.9} parent=0 // pred_region
    _
  $region21: #{resnet_basic_block.9} parent=0 // pred_fallthru
    _
  // Predicated region
  $region22: #{resnet_basic_block.9} parent=0 // pred_check
    _
  $region23: #{resnet_basic_block.9} parent=0 // pred_check_branch
    %22 = sbr.rel (0) target = $region25
  $region24: #{resnet_basic_block.9} parent=0 // pred_region
    _
  $region25: #{resnet_basic_block.9} parent=0 // pred_fallthru
    _
  %v23 = vld [vmem:[%s0] sm:$0xff]
  %v24 = vld [vmem:[%s0 + $0x8] sm:$0xff]
  %v25 = vld [vmem:[%s0 + $0x10] sm:$0xff]
  %v26 = vld [vmem:[%s0 + $0x18] sm:$0xff]
  %v27 = vld [vmem:[%s0 + $0x20] sm:$0xff]
  %v28 = vld [vmem:[%s0 + $0x28] sm:$0xff]
  %v29 = vld [vmem:[%s0 + $0x30] sm:$0xff]
  %v30 = vld [vmem:[%s0 + $0x38] sm:$0xff]
  %v31 = vld [vmem:[%s0 + $0x40] sm:$0xff]
  %v32 = vld [vmem:[%s0 + $0x48] sm:$0xff]
  %v33 = vld [vmem:[%s0 + $0x50] sm:$0xff]
  %v34 = vld [vmem:[%s0 + $0x58] sm:$0xff]
  %v35 = vld [vmem:[%s0 + $0x60] sm:$0xff]
  %v36 = vld [vmem:[%s0 + $0x68] sm:$0xff]
  %v37 = vld [vmem:[%s0 + $0x70] sm:$0xff]
  %v38 = vld [vmem:[%s0 + $0x78] sm:$0xff]
  %v39 = vld [vmem:[%s1] sm:$0x1]
  %v41 = vlaneseq
  %v42 = vshrl.u32 %v41, 7
  %v43 = vsub.s32 0, %v42
  %v44 = vrot.slane %v39, %v43
  %v46 = vmul.f32 %v23, %v44
  %v47 = vmul.f32 %v24, %v44
  %v48 = vmul.f32 %v25, %v44
  %v49 = vmul.f32 %v26, %v44
  %v50 = vmul.f32 %v27, %v44
  %v51 = vmul.f32 %v28, %v44
  %v52 = vmul.f32 %v29, %v44
  %v53 = vmul.f32 %v30, %v44
  %v54 = vmul.f32 %v31, %v44
  %v55 = vmul.f32 %v32, %v44
  %v56 = vmul.f32 %v33, %v44
  %v57 = vmul.f32 %v34, %v44
  %v58 = vmul.f32 %v35, %v44
  %v59 = vmul.f32 %v36, %v44
  %v60 = vmul.f32 %v37, %v44
  %v61 = vmul.f32 %v38, %v44
  %v62 = vld [vmem:[%s2] sm:$0x1]
  %v64 = vlaneseq
  %v65 = vshrl.u32 %v64, 7
  %v66 = vsub.s32 0, %v65
  %v67 = vrot.slane %v62, %v66
  %v69 = vadd.f32 %v46, %v67
  %v70 = vadd.f32 %v47, %v67
  %v71 = vadd.f32 %v48, %v67
  %v72 = vadd.f32 %v49, %v67
  %v73 = vadd.f32 %v50, %v67
  %v74 = vadd.f32 %v51, %v67
  %v75 = vadd.f32 %v52, %v67
  %v76 = vadd.f32 %v53, %v67
  %v77 = vadd.f32 %v54, %v67
  %v78 = vadd.f32 %v55, %v67
  %v79 = vadd.f32 %v56, %v67
  %v80 = vadd.f32 %v57, %v67
  %v81 = vadd.f32 %v58, %v67
  %v82 = vadd.f32 %v59, %v67
  %v83 = vadd.f32 %v60, %v67
  %v84 = vadd.f32 %v61, %v67
  %v85 = vmax.f32 %v69, 0.0
  %v86 = vmax.f32 %v70, 0.0
  %v87 = vmax.f32 %v71, 0.0
  %v88 = vmax.f32 %v72, 0.0
  %v89 = vmax.f32 %v73, 0.0
  %v90 = vmax.f32 %v74, 0.0
  %v91 = vmax.f32 %v75, 0.0
  %v92 = vmax.f32 %v76, 0.0
  %v93 = vmax.f32 %v77, 0.0
  %v94 = vmax.f32 %v78, 0.0
  %v95 = vmax.f32 %v79, 0.0
  %v96 = vmax.f32 %v80, 0.0
  %v97 = vmax.f32 %v81, 0.0
  %v98 = vmax.f32 %v82, 0.0
  %v99 = vmax.f32 %v83, 0.0
  %v100 = vmax.f32 %v84, 0.0
  %v101 = vld [vmem:[%s3] sm:$0xff]
  %v102 = vld [vmem:[%s3 + $0x8] sm:$0xff]
  %v103 = vld [vmem:[%s3 + $0x10] sm:$0xff]
  %v104 = vld [vmem:[%s3 + $0x18] sm:$0xff]
  %v105 = vld [vmem:[%s3 + $0x20] sm:$0xff]
  %v106 = vld [vmem:[%s3 + $0x28] sm:$0xff]
  %v107 = vld [vmem:[%s3 + $0x30] sm:$0xff]
  %v108 = vld [vmem:[%s3 + $0x38] sm:$0xff]
  %v109 = vld [vmem:[%s3 + $0x40] sm:$0xff]
  %v110 = vld [vmem:[%s3 + $0x48] sm:$0xff]
  %v111 = vld [vmem:[%s3 + $0x50] sm:$0xff]
  %v112 = vld [vmem:[%s3 + $0x58] sm:$0xff]
  %v113 = vld [vmem:[%s3 + $0x60] sm:$0xff]
  %v114 = vld [vmem:[%s3 + $0x68] sm:$0xff]
  %v115 = vld [vmem:[%s3 + $0x70] sm:$0xff]
  %v116 = vld [vmem:[%s3 + $0x78] sm:$0xff]
  %v117 = vld [vmem:[%s4] sm:$0x1]
  %v119 = vlaneseq
  %v120 = vshrl.u32 %v119, 7
  %v121 = vsub.s32 0, %v120
  %v122 = vrot.slane %v117, %v121
  %v124 = vmul.f32 %v101, %v122
  %v125 = vmul.f32 %v102, %v122
  %v126 = vmul.f32 %v103, %v122
  %v127 = vmul.f32 %v104, %v122
  %v128 = vmul.f32 %v105, %v122
  %v129 = vmul.f32 %v106, %v122
  %v130 = vmul.f32 %v107, %v122
  %v131 = vmul.f32 %v108, %v122
  %v132 = vmul.f32 %v109, %v122
  %v133 = vmul.f32 %v110, %v122
  %v134 = vmul.f32 %v111, %v122
  %v135 = vmul.f32 %v112, %v122
  %v136 = vmul.f32 %v113, %v122
  %v137 = vmul.f32 %v114, %v122
  %v138 = vmul.f32 %v115, %v122
  %v139 = vmul.f32 %v116, %v122
  %v140 = vld [vmem:[%s5] sm:$0x1]
  %v142 = vlaneseq
  %v143 = vshrl.u32 %v142, 7
  %v144 = vsub.s32 0, %v143
  %v145 = vrot.slane %v140, %v144
  %v147 = vadd.f32 %v124, %v145
  %v148 = vadd.f32 %v125, %v145
  %v149 = vadd.f32 %v126, %v145
  %v150 = vadd.f32 %v127, %v145
  %v151 = vadd.f32 %v128, %v145
  %v152 = vadd.f32 %v129, %v145
  %v153 = vadd.f32 %v130, %v145
  %v154 = vadd.f32 %v131, %v145
  %v155 = vadd.f32 %v132, %v145
  %v156 = vadd.f32 %v133, %v145
  %v157 = vadd.f32 %v134, %v145
  %v158 = vadd.f32 %v135, %v145
  %v159 = vadd.f32 %v136, %v145
  %v160 = vadd.f32 %v137, %v145
  %v161 = vadd.f32 %v138, %v145
  %v162 = vadd.f32 %v139, %v145
  %v163 = vadd.f32 %v85, %v147
  %v164 = vadd.f32 %v86, %v148
  %v165 = vadd.f32 %v87, %v149
  %v166 = vadd.f32 %v88, %v150
  %v167 = vadd.f32 %v89, %v151
  %v168 = vadd.f32 %v90, %v152
  %v169 = vadd.f32 %v91, %v153
  %v170 = vadd.f32 %v92, %v154
  %v171 = vadd.f32 %v93, %v155
  %v172 = vadd.f32 %v94, %v156
  %v173 = vadd.f32 %v95, %v157
  %v174 = vadd.f32 %v96, %v158
  %v175 = vadd.f32 %v97, %v159
  %v176 = vadd.f32 %v98, %v160
  %v177 = vadd.f32 %v99, %v161
  %v178 = vadd.f32 %v100, %v162
  %179 = vst [vmem:[%s6] sm:$0xff] %v163
  %180 = vst [vmem:[%s6 + $0x8] sm:$0xff] %v164
  %181 = vst [vmem:[%s6 + $0x10] sm:$0xff] %v165
  %182 = vst [vmem:[%s6 + $0x18] sm:$0xff] %v166
  %183 = vst [vmem:[%s6 + $0x20] sm:$0xff] %v167
  %184 = vst [vmem:[%s6 + $0x28] sm:$0xff] %v168
  %185 = vst [vmem:[%s6 + $0x30] sm:$0xff] %v169
  %186 = vst [vmem:[%s6 + $0x38] sm:$0xff] %v170
  %187 = vst [vmem:[%s6 + $0x40] sm:$0xff] %v171
  %188 = vst [vmem:[%s6 + $0x48] sm:$0xff] %v172
  %189 = vst [vmem:[%s6 + $0x50] sm:$0xff] %v173
  %190 = vst [vmem:[%s6 + $0x58] sm:$0xff] %v174
  %191 = vst [vmem:[%s6 + $0x60] sm:$0xff] %v175
  %192 = vst [vmem:[%s6 + $0x68] sm:$0xff] %v176
  %193 = vst [vmem:[%s6 + $0x70] sm:$0xff] %v177
  %194 = vst [vmem:[%s6 + $0x78] sm:$0xff] %v178
  // Predicated region
  $region26: #{resnet_basic_block.9} parent=0 // pred_check
    _
  $region27: #{resnet_basic_block.9} parent=0 // pred_check_branch
    %196 = sbr.rel (0) target = $region29
  $region28: #{resnet_basic_block.9} parent=0 // pred_region
    _
  $region29: #{resnet_basic_block.9} parent=0 // pred_fallthru
    _
  // Predicated region
  $region30: #{resnet_basic_block.9} parent=0 // pred_check
    _
  $region31: #{resnet_basic_block.9} parent=0 // pred_check_branch
    %198 = sbr.rel (0) target = $region33
  $region32: #{resnet_basic_block.9} parent=0 // pred_region
    _
  $region33: #{resnet_basic_block.9} parent=0 // pred_fallthru
    _

</llo_original>
